<compile_context>
chip_gen: v6e
topology: v6e:2x2x1
jax: 0.10.0
libtpu: 0.0.40
codegen_flags: <defaults>
</compile_context>

<pallas_src>
import jax
import jax.numpy as jnp
from jax.experimental import pallas as pl
from jax.experimental.pallas import tpu as pltpu


def _mse_partial_kernel(u_ref, v_ref, o_ref):
    """One row tile of shape (tile_r, H*W) -> per-row squared-diff sums
    of the min/max-normalized inputs, written to a (tile_r, 1) block."""
    u = u_ref[...].astype(jnp.float32)
    v = v_ref[...].astype(jnp.float32)

    # Per-row min/max (fused form: max(u - min) == max(u) - min, exact).
    u_mn = jnp.min(u, axis=-1, keepdims=True)
    u_mx = jnp.max(u, axis=-1, keepdims=True)
    v_mn = jnp.min(v, axis=-1, keepdims=True)
    v_mx = jnp.max(v, axis=-1, keepdims=True)

    # One exact divide per ROW (tile_r of them), then per-element multiplies.
    inv_u = 1.0 / ((u_mx - u_mn) + 1e-07)
    inv_v = 1.0 / ((v_mx - v_mn) + 1e-07)

    d = (u - u_mn) * inv_u - (v - v_mn) * inv_v
    o_ref[...] = jnp.sum(d * d, axis=-1, keepdims=True)


def _vmem_budgets():
    """(per_buffer_budget, vmem_limit_bytes) tuned per chip generation."""
    cap = 128 * 1024 * 1024
    try:
        cap = getattr(pltpu.get_tpu_info(), "vmem_capacity_bytes", cap)
    except Exception:
        pass
    if cap <= 64 * 1024 * 1024:
        # v7x: 64 MiB physical VMEM -> 4 buffers x 8 MiB + headroom.
        return 8 * 1024 * 1024, 40 * 1024 * 1024
    # v5e / v6e: 128 MiB physical -> 4 buffers x 14 MiB + headroom.
    return 14 * 1024 * 1024, 72 * 1024 * 1024


def _choose_tile(rows, cols, itemsize, per_buffer_budget):
    """Pick (tile_r, padded_rows): tile_r is a multiple of 8 sized to the
    per-buffer VMEM budget; padded_rows is a tile_r multiple >= rows."""
    rows8 = -(-rows // 8) * 8
    max_r = (per_buffer_budget // max(1, cols * itemsize)) // 8 * 8
    max_r = max(8, max_r)
    if rows8 <= max_r:
        return rows8, rows8
    # Prefer a divisor of rows8 (no padding) if it is not much smaller than
    # the budgeted tile; otherwise pad rows up to a budgeted-tile multiple.
    best = 8
    for t in range(max_r, 7, -8):
        if rows8 % t == 0:
            best = t
            break
    if best * 4 >= max_r:
        return best, rows8
    padded = -(-rows // max_r) * max_r
    return max_r, padded
    # TODO(synk): for H*W so large that even an 8-row full-width block blows
    # the budget (e.g. 2048x2048 images), add a column-tiled two-pass path
    # carrying per-row running min/max in scratch.


def mse_loss(U, V):
    """U, V: NCHW arrays (any float dtype). Returns scalar f32 loss."""
    assert U.shape == V.shape and U.ndim == 4
    B, C, H, W = U.shape
    rows, cols = B * C, H * W

    u2 = U.reshape(rows, cols)
    v2 = V.reshape(rows, cols)

    itemsize = max(jnp.dtype(U.dtype).itemsize, jnp.dtype(V.dtype).itemsize)
    per_buf, vmem_limit = _vmem_budgets()
    tile_r, rows_p = _choose_tile(rows, cols, itemsize, per_buf)

    if rows_p != rows:
        # Zero rows normalize to exactly zero -> contribute 0 to the sum.
        pad = rows_p - rows
        u2 = jnp.pad(u2, ((0, pad), (0, 0)))
        v2 = jnp.pad(v2, ((0, pad), (0, 0)))

    grid = (rows_p // tile_r,)

    partials = pl.pallas_call(
        _mse_partial_kernel,
        out_shape=jax.ShapeDtypeStruct((rows_p, 1), jnp.float32),
        grid_spec=pltpu.PrefetchScalarGridSpec(
            num_scalar_prefetch=0,
            grid=grid,
            in_specs=[
                pl.BlockSpec((tile_r, cols), lambda i: (i, 0)),
                pl.BlockSpec((tile_r, cols), lambda i: (i, 0)),
            ],
            out_specs=pl.BlockSpec((tile_r, 1), lambda i: (i, 0)),
        ),
        compiler_params=pltpu.CompilerParams(
            # Each step writes its own output block -> fully parallel grid;
            # lets v7x shard the stream across both TensorCores.
            dimension_semantics=("parallel",),
            vmem_limit_bytes=vmem_limit,
        ),
    )(u2, v2)

    # Tiny epilogue on the (rows_p, 1) partials: mean over the true B*C rows
    # of ||.||_F^2 / (H*W).  Padded rows are exactly zero.
    return jnp.sum(partials) / (float(rows) * float(cols))


def _mse_loss_ref(U, V):
    """Pure-JAX reference, mirrors the PyTorch module exactly."""
    def normalize_(X):
        X = X - jnp.min(X, axis=(2, 3), keepdims=True)
        X = X / (jnp.max(X, axis=(2, 3), keepdims=True) + 1e-07)
        return X

    nxny = U.shape[2] * U.shape[3]
    Un = normalize_(U)
    Vn = normalize_(V)
    sq = jnp.sum((Un - Vn) ** 2, axis=(2, 3))
    return jnp.mean(sq / nxny)


if __name__ == "__main__":
    key = jax.random.PRNGKey(0)
    k1, k2 = jax.random.split(key)
    B, C, H, W = 2, 4, 16, 16
    U = jax.random.normal(k1, (B, C, H, W), dtype=jnp.float32)
    V = jax.random.normal(k2, (B, C, H, W), dtype=jnp.float32)

    out = mse_loss(U, V)
    out = jax.block_until_ready(out)

    ref = jax.block_until_ready(_mse_loss_ref(U, V))
    assert jnp.allclose(out, ref, rtol=1e-5, atol=1e-6), (out, ref)

    print("KERNEL_OK")
</pallas_src>

<mosaic_0001>
module attributes {stable_mosaic.version = 11 : i64} {
  func.func @_mse_partial_kernel(%arg0: i32, %arg1: memref<8x256xf32, #tpu.memory_space<vmem>>, %arg2: memref<8x256xf32, #tpu.memory_space<vmem>>, %arg3: memref<8x1xf32, #tpu.memory_space<vmem>>) attributes {dimension_semantics = [#tpu.dimension_semantics<parallel>], iteration_bounds = array<i64: 1>, scalar_prefetch = 0 : i64, scratch_operands = 0 : i64, tpu.core_type = #tpu.core_type<tc>, window_params = [{transform_indices = @transform_0, window_bounds = array<i64: 8, 256>}, {transform_indices = @transform_1, window_bounds = array<i64: 8, 256>}, {transform_indices = @transform_2, window_bounds = array<i64: 8, 1>}]} {
    %c0 = arith.constant 0 : index
    %c0_0 = arith.constant 0 : index
    %0 = vector.load %arg1[%c0, %c0_0] : memref<8x256xf32, #tpu.memory_space<vmem>>, vector<8x256xf32>
    %c0_1 = arith.constant 0 : index
    %c0_2 = arith.constant 0 : index
    %1 = vector.load %arg2[%c0_1, %c0_2] : memref<8x256xf32, #tpu.memory_space<vmem>>, vector<8x256xf32>
    %cst = arith.constant dense<0x7F800000> : vector<8xf32>
    %2 = vector.multi_reduction <minimumf>, %0, %cst [1] : vector<8x256xf32> to vector<8xf32>
    %3 = vector.shape_cast %2 : vector<8xf32> to vector<8x1xf32>
    %cst_3 = arith.constant dense<0xFF800000> : vector<8xf32>
    %4 = vector.multi_reduction <maximumf>, %0, %cst_3 [1] : vector<8x256xf32> to vector<8xf32>
    %5 = vector.shape_cast %4 : vector<8xf32> to vector<8x1xf32>
    %cst_4 = arith.constant dense<0x7F800000> : vector<8xf32>
    %6 = vector.multi_reduction <minimumf>, %1, %cst_4 [1] : vector<8x256xf32> to vector<8xf32>
    %7 = vector.shape_cast %6 : vector<8xf32> to vector<8x1xf32>
    %cst_5 = arith.constant dense<0xFF800000> : vector<8xf32>
    %8 = vector.multi_reduction <maximumf>, %1, %cst_5 [1] : vector<8x256xf32> to vector<8xf32>
    %9 = vector.shape_cast %8 : vector<8xf32> to vector<8x1xf32>
    %10 = arith.subf %5, %3 : vector<8x1xf32>
    %cst_6 = arith.constant 1.000000e-07 : f32
    %11 = vector.broadcast %cst_6 : f32 to vector<8x1xf32>
    %12 = arith.addf %10, %11 : vector<8x1xf32>
    %cst_7 = arith.constant 1.000000e+00 : f32
    %13 = vector.broadcast %cst_7 : f32 to vector<8x1xf32>
    %14 = arith.divf %13, %12 : vector<8x1xf32>
    %15 = arith.subf %9, %7 : vector<8x1xf32>
    %cst_8 = arith.constant 1.000000e-07 : f32
    %16 = vector.broadcast %cst_8 : f32 to vector<8x1xf32>
    %17 = arith.addf %15, %16 : vector<8x1xf32>
    %cst_9 = arith.constant 1.000000e+00 : f32
    %18 = vector.broadcast %cst_9 : f32 to vector<8x1xf32>
    %19 = arith.divf %18, %17 : vector<8x1xf32>
    %20 = vector.broadcast %3 : vector<8x1xf32> to vector<8x256xf32>
    %21 = arith.subf %0, %20 : vector<8x256xf32>
    %22 = vector.broadcast %14 : vector<8x1xf32> to vector<8x256xf32>
    %23 = arith.mulf %21, %22 : vector<8x256xf32>
    %24 = vector.broadcast %7 : vector<8x1xf32> to vector<8x256xf32>
    %25 = arith.subf %1, %24 : vector<8x256xf32>
    %26 = vector.broadcast %19 : vector<8x1xf32> to vector<8x256xf32>
    %27 = arith.mulf %25, %26 : vector<8x256xf32>
    %28 = arith.subf %23, %27 : vector<8x256xf32>
    %29 = arith.mulf %28, %28 : vector<8x256xf32>
    %cst_10 = arith.constant dense<0.000000e+00> : vector<8xf32>
    %30 = vector.multi_reduction <add>, %29, %cst_10 [1] : vector<8x256xf32> to vector<8xf32>
    %31 = vector.shape_cast %30 : vector<8xf32> to vector<8x1xf32>
    %c0_11 = arith.constant 0 : index
    %c0_12 = arith.constant 0 : index
    %32 = vector.load %arg3[%c0_11, %c0_12] : memref<8x1xf32, #tpu.memory_space<vmem>>, vector<8x1xf32>
    tpu.vector_store %arg3[%c0_11, %c0_12], %31 {strides = array<i32>} : memref<8x1xf32, #tpu.memory_space<vmem>>, vector<8x1xf32>,
    return
  }
  func.func @transform_0(%arg0: i32) -> (i32, i32) {
    %c0_i32 = arith.constant 0 : i32
    %c0_i32_0 = arith.constant 0 : i32
    return %arg0, %c0_i32 : i32, i32
  }
  func.func @transform_1(%arg0: i32) -> (i32, i32) {
    %c0_i32 = arith.constant 0 : i32
    %c0_i32_0 = arith.constant 0 : i32
    return %arg0, %c0_i32 : i32, i32
  }
  func.func @transform_2(%arg0: i32) -> (i32, i32) {
    %c0_i32 = arith.constant 0 : i32
    %c0_i32_0 = arith.constant 0 : i32
    return %arg0, %c0_i32 : i32, i32
  }
}

</mosaic_0001>

<llo_original>
// kernel: tpu_custom_call.1
$region0: #{tpu_custom_call.1}
  #allocation0 [shape = 'u32[]', space=smem, size = 0x4, offset = 0x4, fixed_abs, tag = 'smem constant byte address 0x4 - core index']
  #allocation1 [shape = 'u32[144,128]{1,0:T(1,128)}', space=vmem, size = 0x12000, scoped, tag = 'internal scratch']
  %s0 = inlined_call_operand.hbm [shape: f32[8,256], index: 0, kind: input, shape index: {}]
  %s1 = inlined_call_operand.hbm [shape: f32[8,256], index: 1, kind: input, shape index: {}]
  %s2 = inlined_call_operand.vmem [shape: f32[8,1], index: 2, kind: output, shape index: {}]
  %s3 = sld [smem:[#allocation0]]
  $region26: #{tpu_custom_call.1} parent=0
    _
  %s5 = ssub.s32 1, %s3
  %s6 = scalar_select 0, %s5, %s3
  $region1: #{tpu_custom_call.1} parent=0
    #allocation2 [shape = 'u8[8192]{0}', space=vmem, size = 0x2000, scoped, tag = 'input window, operand 0, single buffered']
    #allocation3 [shape = 's32[1]{0}', space=sflag, size = 0x4, scoped, tag = 'scoped memory for tpu_custom_call.1']
    #allocation4 [shape = 'u8[8192]{0}', space=vmem, size = 0x2000, scoped, tag = 'input window, operand 1, single buffered']
    #allocation5 [shape = 's32[1]{0}', space=sflag, size = 0x4, scoped, tag = 'scoped memory for tpu_custom_call.1']
    %7 = vsyncpa [#allocation3], 0
    %8 = vsyncpa [#allocation5], 0
    // Predicated region
    $region2: #{tpu_custom_call.1} parent=1 // pred_check
      _
    $region3: #{tpu_custom_call.1} parent=1 // pred_check_branch
      %10 = sbr.rel (0) target = $region5
    $region4: #{tpu_custom_call.1} parent=1 // pred_region
      %s12 = ssub.s32 256, 256
      %13 = vsyncadd [#allocation3], %s12
      %s15 = sshll.u32 [#allocation2], 4
      %s16 = int_to_ptr.vmem [resolvable:$true] %s15
      %18 = dma.hbm_to_vmem [thread:$0]  %s0, 256, %s16, [#allocation3]
    $region5: #{tpu_custom_call.1} parent=1 // pred_fallthru
      _
    // Predicated region
    $region6: #{tpu_custom_call.1} parent=1 // pred_check
      _
    $region7: #{tpu_custom_call.1} parent=1 // pred_check_branch
      %20 = sbr.rel (0) target = $region9
    $region8: #{tpu_custom_call.1} parent=1 // pred_region
      %s22 = ssub.s32 256, 256
      %23 = vsyncadd [#allocation5], %s22
      %s25 = sshll.u32 [#allocation4], 4
      %s26 = int_to_ptr.vmem [resolvable:$true] %s25
      %28 = dma.hbm_to_vmem [thread:$0]  %s1, 256, %s26, [#allocation5]
    $region9: #{tpu_custom_call.1} parent=1 // pred_fallthru
      _
    // Predicated region
    $region10: #{tpu_custom_call.1} parent=1 // pred_check
      _
    $region11: #{tpu_custom_call.1} parent=1 // pred_check_branch
      %30 = sbr.rel (0) target = $region13
    $region12: #{tpu_custom_call.1} parent=1 // pred_region
      %31 = dma.done [#allocation3], 256
    $region13: #{tpu_custom_call.1} parent=1 // pred_fallthru
      _
    // Predicated region
    $region14: #{tpu_custom_call.1} parent=1 // pred_check
      _
    $region15: #{tpu_custom_call.1} parent=1 // pred_check_branch
      %33 = sbr.rel (0) target = $region17
    $region16: #{tpu_custom_call.1} parent=1 // pred_region
      %34 = dma.done [#allocation5], 256
    $region17: #{tpu_custom_call.1} parent=1 // pred_fallthru
      _
    %v35 = vld [vmem:[#allocation2] sm:$0xff]
    %v36 = vld [vmem:[#allocation2 + $0x8] sm:$0xff]
    %v37 = vld [vmem:[#allocation4] sm:$0xff]
    %v38 = vld [vmem:[#allocation4 + $0x8] sm:$0xff]
    %v39 = vmin.f32 %v35, %v36
    %40 = vmin.xlane.f32.xlu0 %v39
    %v41 = vpop.xlane.xlu0 %40
    %v42 = vmax.f32 %v35, %v36
    %43 = vmax.xlane.f32.xlu0 %v42
    %v44 = vpop.xlane.xlu0 %43
    %v45 = vmin.f32 %v37, %v38
    %46 = vmin.xlane.f32.xlu0 %v45
    %v47 = vpop.xlane.xlu0 %46
    %v48 = vmax.f32 %v37, %v38
    %49 = vmax.xlane.f32.xlu0 %v48
    %v50 = vpop.xlane.xlu0 %49
    %v51 = vsub.f32 %v44, %v41
    %v52 = vadd.f32 %v51, 1e-07
    %v53 = vrcp.pop %v52
    %v54 = vmul.f32 1.0, %v53
    %v55 = vsub.f32 %v50, %v47
    %v56 = vadd.f32 %v55, 1e-07
    %v57 = vrcp.pop %v56
    %v58 = vmul.f32 1.0, %v57
    %v59 = vsub.f32 %v35, %v41
    %v60 = vsub.f32 %v36, %v41
    %v61 = vmul.f32 %v59, %v54
    %v62 = vmul.f32 %v60, %v54
    %v63 = vsub.f32 %v37, %v47
    %v64 = vsub.f32 %v38, %v47
    %v65 = vmul.f32 %v63, %v58
    %v66 = vmul.f32 %v64, %v58
    %v67 = vsub.f32 %v61, %v65
    %v68 = vsub.f32 %v62, %v66
    %v69 = vmul.f32 %v67, %v67
    %v70 = vmul.f32 %v68, %v68
    %v71 = vadd.f32 %v69, %v70
    %72 = vadd.xlane.f32.xlu0 %v71
    %v73 = vpop.xlane.xlu0 %72
    %vm74 = vcmask 7168
    %75 = vst.msk [vmem:[%s2] sm:$0xff] %vm74, %v73
    // Predicated region
    $region18: #{tpu_custom_call.1} parent=1 // pred_check
      _
    $region19: #{tpu_custom_call.1} parent=1 // pred_check_branch
      %77 = sbr.rel (0) target = $region21
    $region20: #{tpu_custom_call.1} parent=1 // pred_region
      _
    $region21: #{tpu_custom_call.1} parent=1 // pred_fallthru
      _
    // Predicated region
    $region22: #{tpu_custom_call.1} parent=1 // pred_check
      _
    $region23: #{tpu_custom_call.1} parent=1 // pred_check_branch
      %79 = sbr.rel (0) target = $region25
    $region24: #{tpu_custom_call.1} parent=1 // pred_region
      _
    $region25: #{tpu_custom_call.1} parent=1 // pred_fallthru
      _
    %80 = vsyncpa [#allocation3], 1
    %81 = vsyncpa [#allocation5], 1

</llo_original>
